<compile_context>
chip_gen: v6e
topology: v6e:2x2x1
jax: 0.10.0
libtpu: 0.0.40
codegen_flags: <defaults>
</compile_context>

<pallas_src>
import jax
import jax.numpy as jnp
from jax.experimental import pallas as pl
from jax.experimental.pallas import tpu as pltpu

SUBLANE = 8
LANE = 128


def _round_up(x, m):
    return (x + m - 1) // m * m


# ----------------------------------------------------------------------------
# Pallas kernel: fused feature trunk + all three heads, channel-leading layout
#   feat = relu(W1^T @ x + b1^T)            (hidden, tile_m)
#   out  = [Wb|Wc|Ws|0]^T @ feat + b^T      (32, tile_m)  -- 26 real channels
# ----------------------------------------------------------------------------
def _fused_heads_kernel(x_ref, w1t_ref, b1t_ref, wht_ref, bht_ref, out_ref):
    # x_ref:   (c_in,   tile_m)  channels on sublanes, spatial on lanes
    # w1t_ref: (hidden, c_in)
    # b1t_ref: (hidden, 1)       broadcast along lanes
    # wht_ref: (n_out,  hidden)  packed [Wb|Wc|Ws]^T, zero-padded to 32 rows
    # bht_ref: (n_out,  1)
    # out_ref: (n_out,  tile_m)
    feat = jnp.dot(w1t_ref[...], x_ref[...], preferred_element_type=jnp.float32)
    feat = jnp.maximum(feat + b1t_ref[...], 0.0)
    out = jnp.dot(wht_ref[...], feat, preferred_element_type=jnp.float32) + bht_ref[...]
    out_ref[...] = out.astype(out_ref.dtype)


def fused_heads(x3, w1t, b1t, wht, bht, *, tile_m=8192, out_dtype=jnp.float32):
    """x3: (N, C_in, H*W) f32 channel-leading input (a free reshape of NCHW).

    Returns (N, n_out_padded, H*W) with all three heads' output channels
    stacked (and zero-padded to a multiple of 8) along axis 1.
    """
    n, c_in, hw = x3.shape
    hidden = w1t.shape[0]
    n_out = wht.shape[0]

    # The spatial tile lives on the lane axis: multiple of 128, or the whole
    # extent for tiny maps.
    if hw <= LANE:
        tile_m = hw
    else:
        tile_m = max(LANE, (min(tile_m, hw) // LANE) * LANE)
        if n == 1:
            # v7x megacore: make sure both TensorCores receive grid steps.
            tile_m = min(tile_m, max(LANE, _round_up((hw + 1) // 2, LANE)))

    grid = (n, pl.cdiv(hw, tile_m))  # ragged last block: OOB writes are masked

    return pl.pallas_call(
        _fused_heads_kernel,
        out_shape=jax.ShapeDtypeStruct((n, n_out, hw), out_dtype),
        grid_spec=pltpu.PrefetchScalarGridSpec(
            num_scalar_prefetch=0,
            grid=grid,
            in_specs=[
                # activations: batch squeezed, spatial tiled on lanes
                pl.BlockSpec((None, c_in, tile_m), lambda b, j: (b, 0, j)),
                # weights / biases: constant index_map -> resident in VMEM
                pl.BlockSpec((hidden, c_in), lambda b, j: (0, 0)),
                pl.BlockSpec((hidden, 1), lambda b, j: (0, 0)),
                pl.BlockSpec((n_out, hidden), lambda b, j: (0, 0)),
                pl.BlockSpec((n_out, 1), lambda b, j: (0, 0)),
            ],
            out_specs=pl.BlockSpec((None, n_out, tile_m), lambda b, j: (b, 0, j)),
        ),
        compiler_params=pltpu.CompilerParams(
            dimension_semantics=("parallel", "parallel"),  # megacore on v7x
            vmem_limit_bytes=32 * 1024 * 1024,             # safe on v5e/v6e/v7x
        ),
    )(x3, w1t, b1t, wht, bht)


# ----------------------------------------------------------------------------
# Synthetic nnDetection-style model parameters + head packing
# ----------------------------------------------------------------------------
def init_params(c_in=4, hidden=32, num_anchors=4, num_classes=2, seed=42):
    keys = jax.random.split(jax.random.PRNGKey(seed), 4)
    w1 = jax.random.normal(keys[0], (c_in, hidden), jnp.float32) * 0.1
    b1 = jnp.zeros((1, hidden), jnp.float32)
    wb = jax.random.normal(keys[1], (hidden, num_anchors * 4), jnp.float32) * 0.1
    bb = jnp.zeros((1, num_anchors * 4), jnp.float32)
    wc = jax.random.normal(keys[2], (hidden, num_anchors * num_classes),
                           jnp.float32) * 0.1
    bc = jnp.full((1, num_anchors * num_classes), -2.0, jnp.float32)
    ws = jax.random.normal(keys[3], (hidden, num_classes), jnp.float32) * 0.1
    bs = jnp.zeros((1, num_classes), jnp.float32)
    return dict(w1=w1, b1=b1, wb=wb, bb=bb, wc=wc, bc=bc, ws=ws, bs=bs)


def pack_head_params(params):
    """Concatenate head weights/biases along the output axis, zero-pad to the
    next multiple of 8 (sublane axis), and transpose for the channel-leading
    kernel layout (single MXU pass, 26->32 channel padding instead of ->128)."""
    w_cat = jnp.concatenate([params["wb"], params["wc"], params["ws"]], axis=1)
    b_cat = jnp.concatenate([params["bb"], params["bc"], params["bs"]], axis=1)
    n_real = w_cat.shape[1]
    n_pad = _round_up(n_real, SUBLANE)
    w_t = jnp.pad(w_cat, ((0, 0), (0, n_pad - n_real))).T   # (n_pad, hidden)
    b_t = jnp.pad(b_cat, ((0, 0), (0, n_pad - n_real))).T   # (n_pad, 1)
    return w_t, b_t, n_real


def make_anchors(h, w, num_anchors=4):
    """Deterministic per-level anchor boxes (x1, y1, x2, y2), like nnDetection."""
    anchors = []
    sizes = jnp.array([4.0, 8.0, 16.0, 32.0], jnp.float32)[:num_anchors]
    for stride in (1, 2):  # two pyramid levels
        hh, ww = h // stride, w // stride
        ys = (jnp.arange(hh, dtype=jnp.float32) + 0.5) * stride
        xs = (jnp.arange(ww, dtype=jnp.float32) + 0.5) * stride
        cy, cx = jnp.meshgrid(ys, xs, indexing="ij")
        cy = cy.reshape(-1, 1)
        cx = cx.reshape(-1, 1)
        half = (sizes * stride / 2.0).reshape(1, -1)
        x1 = (cx - half).reshape(-1, 1)
        y1 = (cy - half).reshape(-1, 1)
        x2 = (cx + half).reshape(-1, 1)
        y2 = (cy + half).reshape(-1, 1)
        anchors.append(jnp.concatenate([x1, y1, x2, y2], axis=1))
    return anchors  # List[(hh*ww*num_anchors, 4)]


# ----------------------------------------------------------------------------
# ONNXExportWrapper semantics:
#   tuple(pred_detection.values()) + (cat(anchors),) + tuple(pred_seg.values())
# TODO(synk): the dict/list runtime-type introspection and error branches of
# _structure_outputs are pure Python bookkeeping (no tensor compute); they are
# reproduced here as a fixed flattening order rather than translated to Pallas.
# ----------------------------------------------------------------------------
def make_onnx_export_forward(params, *, h, w, num_anchors=4, num_classes=2,
                             tile_m=8192, out_dtype=jnp.float32):
    wht, bht, _ = pack_head_params(params)
    w1t = params["w1"].T            # (hidden, c_in)
    b1t = params["b1"].T            # (hidden, 1)
    # Anchor generation + torch.cat(anchors) depend only on (H, W, num_anchors):
    # precomputed once at wrapper-build time (hoisted out of the per-call path).
    anchors_concat = jnp.concatenate(make_anchors(h, w, num_anchors), axis=0)

    nb = num_anchors * 4                 # box_deltas channels
    nc = num_anchors * num_classes       # box_logits channels
    ns = num_classes                     # seg_logits channels

    @jax.jit
    def forward(x_nchw):
        n, c, hh, ww = x_nchw.shape
        # NCHW -> (N, C, H*W): a free reshape, no transpose anywhere.
        x3 = x_nchw.reshape(n, c, hh * ww)
        out = fused_heads(x3, w1t, b1t, wht, bht,
                          tile_m=tile_m, out_dtype=out_dtype)  # (N, 32, H*W)
        box = out[:, :nb, :].reshape(n, nb, hh, ww)
        cls = out[:, nb:nb + nc, :].reshape(n, nc, hh, ww)
        seg = out[:, nb + nc:nb + nc + ns, :].reshape(n, ns, hh, ww)
        # ---- _structure_outputs flattening order ----
        return (box, cls, anchors_concat, seg)

    output_names = ["box_deltas", "box_logits", "anchors", "seg_logits"]
    return forward, output_names


# ----------------------------------------------------------------------------
# Pure-JAX reference for correctness checking
# ----------------------------------------------------------------------------
def reference_heads(x_flat, params):
    feat = jnp.maximum(x_flat @ params["w1"] + params["b1"], 0.0)
    return (feat @ params["wb"] + params["bb"],
            feat @ params["wc"] + params["bc"],
            feat @ params["ws"] + params["bs"])


if __name__ == "__main__":
    N, C, H, W = 2, 4, 16, 16
    NUM_ANCHORS, NUM_CLASSES = 4, 2

    key = jax.random.PRNGKey(0)
    x = jax.random.normal(key, (N, C, H, W), jnp.float32)

    params = init_params(c_in=C, hidden=32,
                         num_anchors=NUM_ANCHORS, num_classes=NUM_CLASSES)

    # Small tile_m so the toy shape (H*W = 256) still exercises a multi-step
    # spatial grid; real feature maps would use the 8192 default.
    forward, names = make_onnx_export_forward(
        params, h=H, w=W, num_anchors=NUM_ANCHORS, num_classes=NUM_CLASSES,
        tile_m=128)

    outputs = jax.block_until_ready(forward(x))

    # Correctness check of the Pallas hot path against a pure-JAX reference.
    x_flat = jnp.transpose(x, (0, 2, 3, 1)).reshape(N * H * W, C)
    ref_box, ref_cls, ref_seg = reference_heads(x_flat, params)

    def to_nchw(y_flat, n, hh, ww, co):
        return jnp.transpose(y_flat.reshape(n, hh, ww, co), (0, 3, 1, 2))

    assert names == ["box_deltas", "box_logits", "anchors", "seg_logits"]
    assert outputs[0].shape == (N, NUM_ANCHORS * 4, H, W)
    assert outputs[1].shape == (N, NUM_ANCHORS * NUM_CLASSES, H, W)
    assert outputs[2].shape == (H * W * NUM_ANCHORS + (H // 2) * (W // 2) * NUM_ANCHORS, 4)
    assert outputs[3].shape == (N, NUM_CLASSES, H, W)
    assert jnp.allclose(outputs[0], to_nchw(ref_box, N, H, W, NUM_ANCHORS * 4), atol=1e-5)
    assert jnp.allclose(outputs[1], to_nchw(ref_cls, N, H, W, NUM_ANCHORS * NUM_CLASSES), atol=1e-5)
    assert jnp.allclose(outputs[3], to_nchw(ref_seg, N, H, W, NUM_CLASSES), atol=1e-5)

    # Second check: single-batch + ragged spatial extent (H*W = 320 with
    # tile_m = 256) to validate the masked last block and the N==1 tile clamp.
    H2, W2 = 16, 20
    x2 = jax.random.normal(jax.random.PRNGKey(1), (1, C, H2, W2), jnp.float32)
    forward2, _ = make_onnx_export_forward(
        params, h=H2, w=W2, num_anchors=NUM_ANCHORS, num_classes=NUM_CLASSES,
        tile_m=256)
    out2 = jax.block_until_ready(forward2(x2))

    x2_flat = jnp.transpose(x2, (0, 2, 3, 1)).reshape(H2 * W2, C)
    r_box, r_cls, r_seg = reference_heads(x2_flat, params)
    assert jnp.allclose(out2[0], to_nchw(r_box, 1, H2, W2, NUM_ANCHORS * 4), atol=1e-5)
    assert jnp.allclose(out2[1], to_nchw(r_cls, 1, H2, W2, NUM_ANCHORS * NUM_CLASSES), atol=1e-5)
    assert jnp.allclose(out2[3], to_nchw(r_seg, 1, H2, W2, NUM_CLASSES), atol=1e-5)

    print("KERNEL_OK")
</pallas_src>

<mosaic_0001>
module attributes {stable_mosaic.version = 11 : i64} {
  func.func @_fused_heads_kernel(%arg0: i32, %arg1: i32, %arg2: memref<1x4x128xf32, #tpu.memory_space<vmem>>, %arg3: memref<32x4xf32, #tpu.memory_space<vmem>>, %arg4: memref<32x1xf32, #tpu.memory_space<vmem>>, %arg5: memref<32x32xf32, #tpu.memory_space<vmem>>, %arg6: memref<32x1xf32, #tpu.memory_space<vmem>>, %arg7: memref<1x32x128xf32, #tpu.memory_space<vmem>>) attributes {dimension_semantics = [#tpu.dimension_semantics<parallel>, #tpu.dimension_semantics<parallel>], iteration_bounds = array<i64: 2, 2>, scalar_prefetch = 0 : i64, scratch_operands = 0 : i64, tpu.core_type = #tpu.core_type<tc>, window_params = [{transform_indices = @transform_0, window_bounds = array<i64: 1, 4, 128>}, {pipeline_mode = #tpu.pipeline_mode<synchronous>, transform_indices = @transform_1, window_bounds = array<i64: 32, 4>}, {pipeline_mode = #tpu.pipeline_mode<synchronous>, transform_indices = @transform_2, window_bounds = array<i64: 32, 1>}, {pipeline_mode = #tpu.pipeline_mode<synchronous>, transform_indices = @transform_3, window_bounds = array<i64: 32, 32>}, {pipeline_mode = #tpu.pipeline_mode<synchronous>, transform_indices = @transform_4, window_bounds = array<i64: 32, 1>}, {transform_indices = @transform_5, window_bounds = array<i64: 1, 32, 128>}]} {
    %c0 = arith.constant 0 : index
    %c0_0 = arith.constant 0 : index
    %0 = vector.load %arg3[%c0, %c0_0] : memref<32x4xf32, #tpu.memory_space<vmem>>, vector<32x4xf32>
    %c0_1 = arith.constant 0 : index
    %c0_2 = arith.constant 0 : index
    %c0_3 = arith.constant 0 : index
    %1 = vector.load %arg2[%c0_1, %c0_2, %c0_3] : memref<1x4x128xf32, #tpu.memory_space<vmem>>, vector<1x4x128xf32>
    %2 = vector.shape_cast %1 : vector<1x4x128xf32> to vector<4x128xf32>
    %cst = arith.constant dense<0.000000e+00> : vector<32x128xf32>
    %3 = tpu.matmul %0, %2, %cst {dimension_numbers = #tpu.dot_dimension_numbers<[1], [0], [0], [1], [0, 0, 1, 1], [], []>} : vector<32x4xf32>, vector<4x128xf32>, vector<32x128xf32> -> vector<32x128xf32>
    %c0_4 = arith.constant 0 : index
    %c0_5 = arith.constant 0 : index
    %4 = vector.load %arg4[%c0_4, %c0_5] : memref<32x1xf32, #tpu.memory_space<vmem>>, vector<32x1xf32>
    %5 = vector.broadcast %4 : vector<32x1xf32> to vector<32x128xf32>
    %6 = arith.addf %3, %5 : vector<32x128xf32>
    %cst_6 = arith.constant 0.000000e+00 : f32
    %7 = vector.broadcast %cst_6 : f32 to vector<32x128xf32>
    %8 = arith.maximumf %6, %7 : vector<32x128xf32>
    %c0_7 = arith.constant 0 : index
    %c0_8 = arith.constant 0 : index
    %9 = vector.load %arg5[%c0_7, %c0_8] : memref<32x32xf32, #tpu.memory_space<vmem>>, vector<32x32xf32>
    %cst_9 = arith.constant dense<0.000000e+00> : vector<32x128xf32>
    %10 = tpu.matmul %9, %8, %cst_9 {dimension_numbers = #tpu.dot_dimension_numbers<[1], [0], [0], [1], [0, 0, 1, 1], [], []>} : vector<32x32xf32>, vector<32x128xf32>, vector<32x128xf32> -> vector<32x128xf32>
    %c0_10 = arith.constant 0 : index
    %c0_11 = arith.constant 0 : index
    %11 = vector.load %arg6[%c0_10, %c0_11] : memref<32x1xf32, #tpu.memory_space<vmem>>, vector<32x1xf32>
    %12 = vector.broadcast %11 : vector<32x1xf32> to vector<32x128xf32>
    %13 = arith.addf %10, %12 : vector<32x128xf32>
    %c0_12 = arith.constant 0 : index
    %c0_13 = arith.constant 0 : index
    %c0_14 = arith.constant 0 : index
    %14 = vector.load %arg7[%c0_12, %c0_13, %c0_14] : memref<1x32x128xf32, #tpu.memory_space<vmem>>, vector<1x32x128xf32>
    %15 = vector.shape_cast %14 : vector<1x32x128xf32> to vector<32x128xf32>
    %16 = vector.shape_cast %13 : vector<32x128xf32> to vector<1x32x128xf32>
    tpu.vector_store %arg7[%c0_12, %c0_13, %c0_14], %16 {strides = array<i32>} : memref<1x32x128xf32, #tpu.memory_space<vmem>>, vector<1x32x128xf32>,
    return
  }
  func.func @transform_0(%arg0: i32, %arg1: i32) -> (i32, i32, i32) {
    %c0_i32 = arith.constant 0 : i32
    %c0_i32_0 = arith.constant 0 : i32
    return %arg0, %c0_i32, %arg1 : i32, i32, i32
  }
  func.func @transform_1(%arg0: i32, %arg1: i32) -> (i32, i32) {
    %c0_i32 = arith.constant 0 : i32
    %c0_i32_0 = arith.constant 0 : i32
    %c0_i32_1 = arith.constant 0 : i32
    return %c0_i32, %c0_i32_0 : i32, i32
  }
  func.func @transform_2(%arg0: i32, %arg1: i32) -> (i32, i32) {
    %c0_i32 = arith.constant 0 : i32
    %c0_i32_0 = arith.constant 0 : i32
    %c0_i32_1 = arith.constant 0 : i32
    return %c0_i32, %c0_i32_0 : i32, i32
  }
  func.func @transform_3(%arg0: i32, %arg1: i32) -> (i32, i32) {
    %c0_i32 = arith.constant 0 : i32
    %c0_i32_0 = arith.constant 0 : i32
    %c0_i32_1 = arith.constant 0 : i32
    return %c0_i32, %c0_i32_0 : i32, i32
  }
  func.func @transform_4(%arg0: i32, %arg1: i32) -> (i32, i32) {
    %c0_i32 = arith.constant 0 : i32
    %c0_i32_0 = arith.constant 0 : i32
    %c0_i32_1 = arith.constant 0 : i32
    return %c0_i32, %c0_i32_0 : i32, i32
  }
  func.func @transform_5(%arg0: i32, %arg1: i32) -> (i32, i32, i32) {
    %c0_i32 = arith.constant 0 : i32
    %c0_i32_0 = arith.constant 0 : i32
    return %arg0, %c0_i32, %arg1 : i32, i32, i32
  }
}

</mosaic_0001>

<llo_original>
// kernel: forward.1
$region0: #{forward.1}
  #allocation0 [shape = 'u32[]', space=smem, size = 0x4, offset = 0x4, fixed_abs, tag = 'smem constant byte address 0x4 - core index']
  #allocation1 [shape = 'u32[144,128]{1,0:T(1,128)}', space=vmem, size = 0x12000, scoped, tag = 'internal scratch']
  %s0 = inlined_call_operand.vmem [shape: f32[2,4,256], index: 0, kind: input, shape index: {}]
  %s1 = inlined_call_operand.vmem [shape: f32[32,4], index: 1, kind: input, shape index: {}]
  %s2 = inlined_call_operand.vmem [shape: f32[32,1], index: 2, kind: input, shape index: {}]
  %s3 = inlined_call_operand.vmem [shape: f32[32,32], index: 3, kind: input, shape index: {}]
  %s4 = inlined_call_operand.vmem [shape: f32[32,1], index: 4, kind: input, shape index: {}]
  %s5 = inlined_call_operand.vmem [shape: f32[2,32,256], index: 5, kind: output, shape index: {}]
  %s6 = sld [smem:[#allocation0]]
  $region87: #{forward.1} parent=0
    _
  %s8 = ssub.s32 1, %s6
  %s9 = scalar_select 0, %s8, %s6
  $region1: #{forward.1} parent=0
    #allocation2 [shape = 'u8[32768]{0}', space=vmem, size = 0x8000, scoped, tag = 'output window, operand 0']
    loop: start=0, step=1, limit=6
    $region2: #{forward.1} parent=1 // loop_pre_header
      _
    $region3: #{forward.1} parent=1 // loop_header
      %s11 = sphi 0, %s15
      %p12 = scmp.ge.s32.totalorder %s11, 6
      %s18 = sphi 0, %s30
      %s19 = sphi 0, %s26
      %s20 = sphi 0, %s18
      %s21 = sphi 0, %s19
      %s22 = sphi 0, %s20
      %s23 = sphi 0, %s21
      %s35 = sphi 0, %s37
      %s38 = sphi 0, %s35
      %s39 = sphi 0, %s38
      %s55 = sphi 0, %s39
      %s59 = sphi 0, %s59
      %s61 = sphi 0, %s59
      %s62 = sphi 0, %s61
      %s76 = sphi 0, %s62
      %s80 = sphi 0, %s80
      %s82 = sphi 0, %s80
      %s83 = sphi 0, %s82
      %s97 = sphi 0, %s83
      %s101 = sphi 0, %s101
      %s103 = sphi 0, %s101
      %s104 = sphi 0, %s103
      %s118 = sphi 0, %s104
      %s122 = sphi 0, %s122
      %s124 = sphi 0, %s122
      %s125 = sphi 0, %s124
      %s139 = sphi 0, %s125
      %s147 = sphi 0, %s149
      %s150 = sphi 0, %s147
      %s151 = sphi 0, %s150
      %s167 = sphi 0, %s151
    $region4: #{forward.1} parent=1 // loop_header_branch
      %14 = sbr.rel (%p12) target = $region8
    $region5: #{forward.1} parent=1 // loop_body
      %s16 = ssub.s32 %s11, 1
      %s17 = ssub.s32 %s11, 2
      %s24 = sadd.s32 1, %s19
      %p25 = scmp.ge.s32.totalorder %s24, 2
      %s26 = scalar_select %p25, 0, %s24
      %s27 = sadd.s32 1, %s18
      %s28 = scalar_select %p25, %s27, %s18
      %p29 = scmp.ge.s32.totalorder %s28, 2
      %s30 = scalar_select %p29, 0, %s28
      %s31 = ssub.s32 %s18, %s30
      %s32 = ssub.s32 %s19, %s26
      %s33 = sor.u32 %s31, %s32
      %p34 = scmp.eq.s32.totalorder %s33, 0
      %s36 = sadd.s32 %s35, 1
      %s37 = scalar_select %p34, %s35, %s36
      %p40 = pneg %p34
      %p41 = scmp.eq.s32.totalorder %s11, 3
      %p42 = por %p40, %p41
      %p43 = scmp.ne.s32.totalorder %s35, %s38
      %p44 = scmp.eq.s32.totalorder %s11, 0
      %p45 = por %p43, %p44
      %p46 = scmp.ne.s32.totalorder %s35, %s38
      %p47 = scmp.eq.s32.totalorder %s16, 3
      %p48 = por %p46, %p47
      %p49 = scmp.ne.s32.totalorder %s38, %s39
      %p50 = scmp.eq.s32.totalorder %s16, 0
      %p51 = por %p49, %p50
      %p52 = scmp.ne.s32.totalorder %s38, %s39
      %p53 = scmp.eq.s32.totalorder %s17, 3
      %p54 = por %p52, %p53
      %p56 = scmp.ne.s32.totalorder %s39, %s55
      %p57 = scmp.eq.s32.totalorder %s17, 0
      %p58 = por %p56, %p57
      %s60 = sadd.s32 %s59, 1
      %p63 = scmp.eq.s32.totalorder %s11, 3
      %p64 = scmp.ne.s32.totalorder %s59, %s61
      %p65 = scmp.eq.s32.totalorder %s11, 0
      %p66 = por %p64, %p65
      %p67 = scmp.ne.s32.totalorder %s59, %s61
      %p68 = scmp.eq.s32.totalorder %s16, 3
      %p69 = por %p67, %p68
      %p70 = scmp.ne.s32.totalorder %s61, %s62
      %p71 = scmp.eq.s32.totalorder %s16, 0
      %p72 = por %p70, %p71
      %p73 = scmp.ne.s32.totalorder %s61, %s62
      %p74 = scmp.eq.s32.totalorder %s17, 3
      %p75 = por %p73, %p74
      %p77 = scmp.ne.s32.totalorder %s62, %s76
      %p78 = scmp.eq.s32.totalorder %s17, 0
      %p79 = por %p77, %p78
      %s81 = sadd.s32 %s80, 1
      %p84 = scmp.eq.s32.totalorder %s11, 3
      %p85 = scmp.ne.s32.totalorder %s80, %s82
      %p86 = scmp.eq.s32.totalorder %s11, 0
      %p87 = por %p85, %p86
      %p88 = scmp.ne.s32.totalorder %s80, %s82
      %p89 = scmp.eq.s32.totalorder %s16, 3
      %p90 = por %p88, %p89
      %p91 = scmp.ne.s32.totalorder %s82, %s83
      %p92 = scmp.eq.s32.totalorder %s16, 0
      %p93 = por %p91, %p92
      %p94 = scmp.ne.s32.totalorder %s82, %s83
      %p95 = scmp.eq.s32.totalorder %s17, 3
      %p96 = por %p94, %p95
      %p98 = scmp.ne.s32.totalorder %s83, %s97
      %p99 = scmp.eq.s32.totalorder %s17, 0
      %p100 = por %p98, %p99
      %s102 = sadd.s32 %s101, 1
      %p105 = scmp.eq.s32.totalorder %s11, 3
      %p106 = scmp.ne.s32.totalorder %s101, %s103
      %p107 = scmp.eq.s32.totalorder %s11, 0
      %p108 = por %p106, %p107
      %p109 = scmp.ne.s32.totalorder %s101, %s103
      %p110 = scmp.eq.s32.totalorder %s16, 3
      %p111 = por %p109, %p110
      %p112 = scmp.ne.s32.totalorder %s103, %s104
      %p113 = scmp.eq.s32.totalorder %s16, 0
      %p114 = por %p112, %p113
      %p115 = scmp.ne.s32.totalorder %s103, %s104
      %p116 = scmp.eq.s32.totalorder %s17, 3
      %p117 = por %p115, %p116
      %p119 = scmp.ne.s32.totalorder %s104, %s118
      %p120 = scmp.eq.s32.totalorder %s17, 0
      %p121 = por %p119, %p120
      %s123 = sadd.s32 %s122, 1
      %p126 = scmp.eq.s32.totalorder %s11, 3
      %p127 = scmp.ne.s32.totalorder %s122, %s124
      %p128 = scmp.eq.s32.totalorder %s11, 0
      %p129 = por %p127, %p128
      %p130 = scmp.ne.s32.totalorder %s122, %s124
      %p131 = scmp.eq.s32.totalorder %s16, 3
      %p132 = por %p130, %p131
      %p133 = scmp.ne.s32.totalorder %s124, %s125
      %p134 = scmp.eq.s32.totalorder %s16, 0
      %p135 = por %p133, %p134
      %p136 = scmp.ne.s32.totalorder %s124, %s125
      %p137 = scmp.eq.s32.totalorder %s17, 3
      %p138 = por %p136, %p137
      %p140 = scmp.ne.s32.totalorder %s125, %s139
      %p141 = scmp.eq.s32.totalorder %s17, 0
      %p142 = por %p140, %p141
      %s143 = ssub.s32 %s18, %s30
      %s144 = ssub.s32 %s19, %s26
      %s145 = sor.u32 %s143, %s144
      %p146 = scmp.eq.s32.totalorder %s145, 0
      %s148 = sadd.s32 %s147, 1
      %s149 = scalar_select %p146, %s147, %s148
      %p152 = pneg %p146
      %p153 = scmp.eq.s32.totalorder %s11, 3
      %p154 = por %p152, %p153
      %p155 = scmp.ne.s32.totalorder %s147, %s150
      %p156 = scmp.eq.s32.totalorder %s11, 0
      %p157 = por %p155, %p156
      %p158 = scmp.ne.s32.totalorder %s147, %s150
      %p159 = scmp.eq.s32.totalorder %s16, 3
      %p160 = por %p158, %p159
      %p161 = scmp.ne.s32.totalorder %s150, %s151
      %p162 = scmp.eq.s32.totalorder %s16, 0
      %p163 = por %p161, %p162
      %p164 = scmp.ne.s32.totalorder %s150, %s151
      %p165 = scmp.eq.s32.totalorder %s17, 3
      %p166 = por %p164, %p165
      %p168 = scmp.ne.s32.totalorder %s151, %s167
      %p169 = scmp.eq.s32.totalorder %s17, 0
      %p170 = por %p168, %p169
      %p171 = scmp.le.s32.totalorder 1, %s11
      %p172 = scmp.lt.s32.totalorder %s11, 5
      %p173 = pnand %p171, %p172
      %p174 = pneg %p173
      // Predicated region
      $region9: #{forward.1} parent=5 // pred_check
        _
      $region10: #{forward.1} parent=5 // pred_check_branch
        %176 = sbr.rel (%p173) target = $region12
      $region11: #{forward.1} parent=5 // pred_region
        %s177 = ssub.s32 %s11, 1
        // Predicated region
        $region13: #{forward.1} parent=11 // pred_check
          %p178 = pneg %p72
        $region14: #{forward.1} parent=11 // pred_check_branch
          %180 = sbr.rel (%p178) target = $region16
        $region15: #{forward.1} parent=11 // pred_region
          _
        $region16: #{forward.1} parent=11 // pred_fallthru
          _
        // Predicated region
        $region17: #{forward.1} parent=11 // pred_check
          %p181 = pneg %p93
        $region18: #{forward.1} parent=11 // pred_check_branch
          %183 = sbr.rel (%p181) target = $region20
        $region19: #{forward.1} parent=11 // pred_region
          _
        $region20: #{forward.1} parent=11 // pred_fallthru
          _
        // Predicated region
        $region21: #{forward.1} parent=11 // pred_check
          %p184 = pneg %p114
        $region22: #{forward.1} parent=11 // pred_check_branch
          %186 = sbr.rel (%p184) target = $region24
        $region23: #{forward.1} parent=11 // pred_region
          _
        $region24: #{forward.1} parent=11 // pred_fallthru
          _
        // Predicated region
        $region25: #{forward.1} parent=11 // pred_check
          %p187 = pneg %p135
        $region26: #{forward.1} parent=11 // pred_check_branch
          %189 = sbr.rel (%p187) target = $region28
        $region27: #{forward.1} parent=11 // pred_region
          _
        $region28: #{forward.1} parent=11 // pred_fallthru
          _
      $region12: #{forward.1} parent=5 // pred_fallthru
        _
      %p190 = scmp.lt.s32.totalorder %s11, 4
      // Predicated region
      $region29: #{forward.1} parent=5 // pred_check
        %p191 = pneg %p190
      $region30: #{forward.1} parent=5 // pred_check_branch
        %193 = sbr.rel (%p191) target = $region32
      $region31: #{forward.1} parent=5 // pred_region
        // Predicated region
        $region33: #{forward.1} parent=31 // pred_check
          %p194 = pneg %p45
        $region34: #{forward.1} parent=31 // pred_check_branch
          %196 = sbr.rel (%p194) target = $region36
        $region35: #{forward.1} parent=31 // pred_region
          %p197 = scmp.lt.s32.totalorder %s18, 1
          %s198 = scalar_select %p197, %s18, 1
          %p199 = scmp.lt.s32.totalorder %s19, 1
          %s200 = scalar_select %p199, %s19, 1
          %s201 = smul.addr %s198, 2
          %s202 = sadd.s32 %s200, %s201
          %s203 = smul.addr %s202, 4
          %s204 = scalar_lea.vmem %s0, %s203
        $region36: #{forward.1} parent=31 // pred_fallthru
          _
      $region32: #{forward.1} parent=5 // pred_fallthru
        _
      %p205 = scmp.le.s32.totalorder 1, %s11
      %p206 = scmp.lt.s32.totalorder %s11, 5
      %p207 = pnand %p205, %p206
      %p208 = pneg %p207
      // Predicated region
      $region37: #{forward.1} parent=5 // pred_check
        _
      $region38: #{forward.1} parent=5 // pred_check_branch
        %210 = sbr.rel (%p207) target = $region40
      $region39: #{forward.1} parent=5 // pred_region
        %s211 = ssub.s32 %s11, 1
        %p212 = scmp.lt.s32.totalorder %s20, 1
        %s213 = scalar_select %p212, %s20, 1
        %p214 = scmp.lt.s32.totalorder %s21, 1
        %s215 = scalar_select %p214, %s21, 1
        %s216 = smul.addr %s213, 2
        %s217 = sadd.s32 %s215, %s216
        %s218 = smul.addr %s217, 4
        %s219 = scalar_lea.vmem %s0, %s218
        %p220 = pneg %p51
        %p221 = pneg %p48
        %p222 = pneg %p72
        %p223 = pneg %p69
        %p224 = pneg %p93
        %p225 = pneg %p90
        %p226 = pneg %p114
        %p227 = pneg %p111
        %p228 = pneg %p135
        %p229 = pneg %p132
        %p230 = pneg %p163
        %p231 = pneg %p160
        %s232 = sand.u32 %s150, 1
        %s233 = sand.u32 %s150, 1
        %s234 = smul.addr %s233, 32
        %s235 = scalar_lea.vmem [#allocation2], %s234
        %p236 = scmp.lt.s32.totalorder %s20, 1
        %s237 = scalar_select %p236, %s20, 1
        %p238 = scmp.lt.s32.totalorder %s21, 1
        %s239 = scalar_select %p238, %s21, 1
        %s240 = smul.addr %s237, 2
        %s241 = sadd.s32 %s239, %s240
        %s242 = smul.addr %s241, 4
        %s243 = scalar_lea.vmem %s0, %s242
        %v244 = vld [vmem:[%s1] sm:$0xff]
        %v245 = vld [vmem:[%s1 + $0x8] sm:$0xff]
        %v246 = vld [vmem:[%s1 + $0x10] sm:$0xff]
        %v247 = vld [vmem:[%s1 + $0x18] sm:$0xff]
        %v248 = vld [vmem:[%s243] sm:$0xf]
        %v249 = vld [vmem:[%s2] sm:$0xff]
        %v250 = vld [vmem:[%s2 + $0x8] sm:$0xff]
        %v251 = vld [vmem:[%s2 + $0x10] sm:$0xff]
        %v252 = vld [vmem:[%s2 + $0x18] sm:$0xff]
        %254 = vset.pattern.permute.xlu0 0
        %255 = vperm.xlu0 %254, %v249
        %v256 = vpop.permute.xlu0 %255
        %259 = vset.pattern.permute.xlu0 0
        %260 = vperm.xlu0 %259, %v250
        %v261 = vpop.permute.xlu0 %260
        %264 = vset.pattern.permute.xlu0 0
        %265 = vperm.xlu0 %264, %v251
        %v266 = vpop.permute.xlu0 %265
        %269 = vset.pattern.permute.xlu0 0
        %270 = vperm.xlu0 %269, %v252
        %v271 = vpop.permute.xlu0 %270
        %vm273 = vcmask 31744
        %v275 = vsel %vm273, %v244, 0
        %v278 = vsel %vm273, %v245, 0
        %v281 = vsel %vm273, %v246, 0
        %v284 = vsel %vm273, %v247, 0
        %vm286 = vcmask 1043456
        %v288 = vsel %vm286, %v248, 0
        %290 = vmatprep.subr.mxu0 0.0
        %291 = vmatpush1.msra.mxu0 0.0
        %292 = vmatprep.subr.mxu0 0.0
        %293 = vmatpush1.msra.mxu0 0.0
        %294 = vmatprep.subr.mxu0 0.0
        %295 = vmatpush1.msra.mxu0 0.0
        %296 = vmatprep.subr.mxu0 0.0
        %297 = vmatpush1.msra.mxu0 0.0
        %298 = vmatprep.subr.mxu0 0.0
        %299 = vmatpush1.msra.mxu0 0.0
        %300 = vmatprep.subr.mxu0 0.0
        %301 = vmatpush1.msra.mxu0 0.0
        %302 = vmatprep.subr.mxu0 0.0
        %303 = vmatpush1.msra.mxu0 0.0
        %304 = vmatprep.subr.mxu0 0.0
        %305 = vmatpush1.msra.mxu0 0.0
        %306 = vmatprep.subr.mxu0 0.0
        %307 = vmatpush1.msra.mxu0 0.0
        %308 = vmatprep.subr.mxu0 0.0
        %309 = vmatpush1.msra.mxu0 0.0
        %310 = vmatprep.subr.mxu0 0.0
        %311 = vmatpush1.msra.mxu0 0.0
        %312 = vmatprep.subr.mxu0 0.0
        %313 = vmatpush1.msra.mxu0 0.0
        %314 = vmatprep.subr.mxu0 0.0
        %315 = vmatpush1.msra.mxu0 0.0
        %316 = vmatprep.subr.mxu0 0.0
        %317 = vmatpush1.msra.mxu0 0.0
        %318 = vmatprep.subr.mxu0 0.0
        %319 = vmatpush1.msra.mxu0 0.0
        %320 = vmatprep.subr.mxu0 0.0
        %321 = vmatpush1.msra.mxu0 %v288
        %322 = vmatprep.subr.mxu0 0.0
        %323 = vmatpush2.msra.mxu0 0.0
        %324 = vmatprep.subr.mxu0 0.0
        %325 = vmatpush2.msra.mxu0 0.0
        %326 = vmatprep.subr.mxu0 0.0
        %327 = vmatpush2.msra.mxu0 0.0
        %328 = vmatprep.subr.mxu0 0.0
        %329 = vmatpush2.msra.mxu0 0.0
        %330 = vmatprep.subr.mxu0 0.0
        %331 = vmatpush2.msra.mxu0 0.0
        %332 = vmatprep.subr.mxu0 0.0
        %333 = vmatpush2.msra.mxu0 0.0
        %334 = vmatprep.subr.mxu0 0.0
        %335 = vmatpush2.msra.mxu0 0.0
        %336 = vmatprep.subr.mxu0 0.0
        %337 = vmatpush2.msra.mxu0 0.0
        %338 = vmatprep.subr.mxu0 0.0
        %339 = vmatpush2.msra.mxu0 0.0
        %340 = vmatprep.subr.mxu0 0.0
        %341 = vmatpush2.msra.mxu0 0.0
        %342 = vmatprep.subr.mxu0 0.0
        %343 = vmatpush2.msra.mxu0 0.0
        %344 = vmatprep.subr.mxu0 0.0
        %345 = vmatpush2.msra.mxu0 0.0
        %346 = vmatprep.subr.mxu0 0.0
        %347 = vmatpush2.msra.mxu0 0.0
        %348 = vmatprep.subr.mxu0 0.0
        %349 = vmatpush2.msra.mxu0 0.0
        %350 = vmatprep.subr.mxu0 0.0
        %351 = vmatpush2.msra.mxu0 0.0
        %352 = vmatprep.subr.mxu0 0.0
        %353 = vmatpush2.msra.mxu0 0.0
        %354 = vmatprep.mubr.f32.mxu0 0.0
        %355 = vmatmul.mubr.f32.gmra.mxu0 %v275
        %v356 = vpop.f32.mrf.mxu0
        %v357 = vadd.f32 %v256, %v356
        %v358 = vpop.f32.mrf.mxu0
        %359 = vmatprep.mubr.f32.mxu0 0.0
        %360 = vmatmul.mubr.f32.gmra.mxu0 %v278
        %v361 = vpop.f32.mrf.mxu0
        %v362 = vadd.f32 %v261, %v361
        %v363 = vpop.f32.mrf.mxu0
        %364 = vmatprep.mubr.f32.mxu0 0.0
        %365 = vmatmul.mubr.f32.gmra.mxu0 %v281
        %v366 = vpop.f32.mrf.mxu0
        %v367 = vadd.f32 %v266, %v366
        %v368 = vpop.f32.mrf.mxu0
        %369 = vmatprep.mubr.f32.mxu0 0.0
        %370 = vmatmul.mubr.f32.gmra.mxu0 %v284
        %v371 = vpop.f32.mrf.mxu0
        %v372 = vadd.f32 %v271, %v371
        %v373 = vpop.f32.mrf.mxu0
        %374 = vdwg.mxu0
        %v375 = vmax.f32 %v357, 0.0
        %v376 = vmax.f32 %v362, 0.0
        %v377 = vmax.f32 %v367, 0.0
        %v378 = vmax.f32 %v372, 0.0
        %v379 = vld [vmem:[%s3] sm:$0xff]
        %v380 = vld [vmem:[%s3 + $0x8] sm:$0xff]
        %v381 = vld [vmem:[%s3 + $0x10] sm:$0xff]
        %v382 = vld [vmem:[%s3 + $0x18] sm:$0xff]
        %v383 = vld [vmem:[%s4] sm:$0xff]
        %v384 = vld [vmem:[%s4 + $0x8] sm:$0xff]
        %v385 = vld [vmem:[%s4 + $0x10] sm:$0xff]
        %v386 = vld [vmem:[%s4 + $0x18] sm:$0xff]
        %388 = vset.pattern.permute.xlu0 0
        %389 = vperm.xlu0 %388, %v383
        %v390 = vpop.permute.xlu0 %389
        %393 = vset.pattern.permute.xlu0 0
        %394 = vperm.xlu0 %393, %v384
        %v395 = vpop.permute.xlu0 %394
        %398 = vset.pattern.permute.xlu0 0
        %399 = vperm.xlu0 %398, %v385
        %v400 = vpop.permute.xlu0 %399
        %403 = vset.pattern.permute.xlu0 0
        %404 = vperm.xlu0 %403, %v386
        %v405 = vpop.permute.xlu0 %404
        %vm407 = vcmask 261120
        %v409 = vsel %vm407, %v379, 0
        %v412 = vsel %vm407, %v380, 0
        %v415 = vsel %vm407, %v381, 0
        %v418 = vsel %vm407, %v382, 0
        %420 = vmatprep.subr.mxu0 0.0
        %421 = vmatpush1.msra.mxu0 0.0
        %422 = vmatprep.subr.mxu0 0.0
        %423 = vmatpush1.msra.mxu0 0.0
        %424 = vmatprep.subr.mxu0 0.0
        %425 = vmatpush1.msra.mxu0 0.0
        %426 = vmatprep.subr.mxu0 0.0
        %427 = vmatpush1.msra.mxu0 0.0
        %428 = vmatprep.subr.mxu0 0.0
        %429 = vmatpush1.msra.mxu0 0.0
        %430 = vmatprep.subr.mxu0 0.0
        %431 = vmatpush1.msra.mxu0 0.0
        %432 = vmatprep.subr.mxu0 0.0
        %433 = vmatpush1.msra.mxu0 0.0
        %434 = vmatprep.subr.mxu0 0.0
        %435 = vmatpush1.msra.mxu0 0.0
        %436 = vmatprep.subr.mxu0 0.0
        %437 = vmatpush1.msra.mxu0 0.0
        %438 = vmatprep.subr.mxu0 0.0
        %439 = vmatpush1.msra.mxu0 0.0
        %440 = vmatprep.subr.mxu0 0.0
        %441 = vmatpush1.msra.mxu0 0.0
        %442 = vmatprep.subr.mxu0 0.0
        %443 = vmatpush1.msra.mxu0 0.0
        %444 = vmatprep.subr.mxu0 0.0
        %445 = vmatpush1.msra.mxu0 %v378
        %446 = vmatprep.subr.mxu0 0.0
        %447 = vmatpush1.msra.mxu0 %v377
        %448 = vmatprep.subr.mxu0 0.0
        %449 = vmatpush1.msra.mxu0 %v376
        %450 = vmatprep.subr.mxu0 0.0
        %451 = vmatpush1.msra.mxu0 %v375
        %452 = vmatprep.subr.mxu0 0.0
        %453 = vmatpush2.msra.mxu0 0.0
        %454 = vmatprep.subr.mxu0 0.0
        %455 = vmatpush2.msra.mxu0 0.0
        %456 = vmatprep.subr.mxu0 0.0
        %457 = vmatpush2.msra.mxu0 0.0
        %458 = vmatprep.subr.mxu0 0.0
        %459 = vmatpush2.msra.mxu0 0.0
        %460 = vmatprep.subr.mxu0 0.0
        %461 = vmatpush2.msra.mxu0 0.0
        %462 = vmatprep.subr.mxu0 0.0
        %463 = vmatpush2.msra.mxu0 0.0
        %464 = vmatprep.subr.mxu0 0.0
        %465 = vmatpush2.msra.mxu0 0.0
        %466 = vmatprep.subr.mxu0 0.0
        %467 = vmatpush2.msra.mxu0 0.0
        %468 = vmatprep.subr.mxu0 0.0
        %469 = vmatpush2.msra.mxu0 0.0
        %470 = vmatprep.subr.mxu0 0.0
        %471 = vmatpush2.msra.mxu0 0.0
        %472 = vmatprep.subr.mxu0 0.0
        %473 = vmatpush2.msra.mxu0 0.0
        %474 = vmatprep.subr.mxu0 0.0
        %475 = vmatpush2.msra.mxu0 0.0
        %476 = vmatprep.subr.mxu0 0.0
        %477 = vmatpush2.msra.mxu0 0.0
        %478 = vmatprep.subr.mxu0 0.0
        %479 = vmatpush2.msra.mxu0 0.0
        %480 = vmatprep.subr.mxu0 0.0
        %481 = vmatpush2.msra.mxu0 0.0
        %482 = vmatprep.subr.mxu0 0.0
        %483 = vmatpush2.msra.mxu0 0.0
        %484 = vmatprep.mubr.f32.mxu0 0.0
        %485 = vmatmul.mubr.f32.gmra.mxu0 %v409
        %v486 = vpop.f32.mrf.mxu0
        %v487 = vadd.f32 %v390, %v486
        %v488 = vpop.f32.mrf.mxu0
        %489 = vmatprep.mubr.f32.mxu0 0.0
        %490 = vmatmul.mubr.f32.gmra.mxu0 %v412
        %v491 = vpop.f32.mrf.mxu0
        %v492 = vadd.f32 %v395, %v491
        %v493 = vpop.f32.mrf.mxu0
        %494 = vmatprep.mubr.f32.mxu0 0.0
        %495 = vmatmul.mubr.f32.gmra.mxu0 %v415
        %v496 = vpop.f32.mrf.mxu0
        %v497 = vadd.f32 %v400, %v496
        %v498 = vpop.f32.mrf.mxu0
        %499 = vmatprep.mubr.f32.mxu0 0.0
        %500 = vmatmul.mubr.f32.gmra.mxu0 %v418
        %v501 = vpop.f32.mrf.mxu0
        %v502 = vadd.f32 %v405, %v501
        %v503 = vpop.f32.mrf.mxu0
        %504 = vdwg.mxu0
        %505 = vst [vmem:[%s235] sm:$0xff] %v487
        %506 = vst [vmem:[%s235 + $0x8] sm:$0xff] %v492
        %507 = vst [vmem:[%s235 + $0x10] sm:$0xff] %v497
        %508 = vst [vmem:[%s235 + $0x18] sm:$0xff] %v502
        %s509 = sand.u32 %s150, 1
        %s510 = sand.u32 %s150, 1
        %s511 = smul.addr %s510, 32
        %s512 = scalar_lea.vmem [#allocation2], %s511
        // Predicated region
        $region41: #{forward.1} parent=39 // pred_check
          %p513 = pneg %p160
        $region42: #{forward.1} parent=39 // pred_check_branch
          %515 = sbr.rel (%p513) target = $region44
        $region43: #{forward.1} parent=39 // pred_region
          %s516 = smul.addr %s20, 8
          %s517 = sadd.s32 %s21, %s516
          %s518 = smul.addr %s517, 8
          %s519 = scalar_lea.vmem %s5, %s518
          // Predicated region
          $region45: #{forward.1} parent=43 // pred_check
            _
          $region46: #{forward.1} parent=43 // pred_check_branch
            %521 = sbr.rel (0) target = $region48
          $region47: #{forward.1} parent=43 // pred_region
            // Predicated region
            $region49: #{forward.1} parent=47 // pred_check
              _
            $region50: #{forward.1} parent=47 // pred_check_branch
              %523 = sbr.rel (0) target = $region52
            $region51: #{forward.1} parent=47 // pred_region
              // Predicated region
              $region64: #{forward.1} parent=51 // pred_check
                _
              $region65: #{forward.1} parent=51 // pred_check_branch
                %545 = sbr.rel (0) target = $region67
              $region66: #{forward.1} parent=51 // pred_region
                loop: start=0, step=1, limit=1
                $region68: #{forward.1} parent=66 // loop_pre_header
                  _
                $region69: #{forward.1} parent=66 // loop_header
                  %s547 = sphi 0, %s551
                  %p548 = scmp.ge.s32.totalorder %s547, 1
                  %s552 = sphi %s512, %s512
                  %s553 = sphi %s519, %s519
                $region70: #{forward.1} parent=66 // loop_header_branch
                  %550 = sbr.rel (%p548) target = $region74
                $region71: #{forward.1} parent=66 // loop_body
                  %v554 = vld [vmem:[%s552] sm:$0xff]
                  %555 = vst [vmem:[%s553] sm:$0xff] %v554
                  %v556 = vld [vmem:[%s552 + $0x8] sm:$0xff]
                  %557 = vst [vmem:[%s553 + $0x10] sm:$0xff] %v556
                  %v558 = vld [vmem:[%s552 + $0x10] sm:$0xff]
                  %559 = vst [vmem:[%s553 + $0x20] sm:$0xff] %v558
                  %v560 = vld [vmem:[%s552 + $0x18] sm:$0xff]
                  %561 = vst [vmem:[%s553 + $0x30] sm:$0xff] %v560
                $region72: #{forward.1} parent=66 // loop_footer
                  %s551 = sadd.s32 1, %s547
                $region73: #{forward.1} parent=66 // loop_footer_branch
                  %546 = sbr.rel target = $region69
                $region74: #{forward.1} parent=66 // loop_exit
                  _
              $region67: #{forward.1} parent=51 // pred_fallthru
                _
              // Predicated region
              $region75: #{forward.1} parent=51 // pred_check
                _
              $region76: #{forward.1} parent=51 // pred_check_branch
                %563 = sbr.rel target = $region78
              $region77: #{forward.1} parent=51 // pred_region
                _
              $region78: #{forward.1} parent=51 // pred_fallthru
                _
            $region52: #{forward.1} parent=47 // pred_fallthru
              _
            // Predicated region
            $region53: #{forward.1} parent=47 // pred_check
              _
            $region54: #{forward.1} parent=47 // pred_check_branch
              %525 = sbr.rel target = $region56
            $region55: #{forward.1} parent=47 // pred_region
              %s527 = ssub.s32 256, 1
              loop: start=0, step=1, limit=1
              $region57: #{forward.1} parent=55 // loop_pre_header
                _
              $region58: #{forward.1} parent=55 // loop_header
                %s529 = sphi 0, %s533
                %p530 = scmp.ge.s32.totalorder %s529, 1
                %s534 = sphi %s512, %s512
                %s535 = sphi %s519, %s519
              $region59: #{forward.1} parent=55 // loop_header_branch
                %532 = sbr.rel (%p530) target = $region63
              $region60: #{forward.1} parent=55 // loop_body
                %v536 = vld [vmem:[%s534] sm:%s527]
                %537 = vst [vmem:[%s535] sm:%s527] %v536
                %v538 = vld [vmem:[%s534 + $0x8] sm:%s527]
                %539 = vst [vmem:[%s535 + $0x10] sm:%s527] %v538
                %v540 = vld [vmem:[%s534 + $0x10] sm:%s527]
                %541 = vst [vmem:[%s535 + $0x20] sm:%s527] %v540
                %v542 = vld [vmem:[%s534 + $0x18] sm:%s527]
                %543 = vst [vmem:[%s535 + $0x30] sm:%s527] %v542
              $region61: #{forward.1} parent=55 // loop_footer
                %s533 = sadd.s32 1, %s529
              $region62: #{forward.1} parent=55 // loop_footer_branch
                %528 = sbr.rel target = $region58
              $region63: #{forward.1} parent=55 // loop_exit
                _
            $region56: #{forward.1} parent=47 // pred_fallthru
              _
          $region48: #{forward.1} parent=43 // pred_fallthru
            _
          %564 = vnop
        $region44: #{forward.1} parent=39 // pred_fallthru
          _
      $region40: #{forward.1} parent=5 // pred_fallthru
        _
      %p565 = scmp.le.s32.totalorder 2, %s11
      // Predicated region
      $region79: #{forward.1} parent=5 // pred_check
        %p566 = pneg %p565
      $region80: #{forward.1} parent=5 // pred_check_branch
        %568 = sbr.rel (%p566) target = $region82
      $region81: #{forward.1} parent=5 // pred_region
        %s569 = ssub.s32 %s11, 2
        // Predicated region
        $region83: #{forward.1} parent=81 // pred_check
          %p570 = pneg %p166
        $region84: #{forward.1} parent=81 // pred_check_branch
          %572 = sbr.rel (%p570) target = $region86
        $region85: #{forward.1} parent=81 // pred_region
          %s573 = sand.u32 %s151, 1
          %s574 = sand.u32 %s151, 1
          %s575 = smul.addr %s574, 32
          %s576 = scalar_lea.vmem [#allocation2], %s575
        $region86: #{forward.1} parent=81 // pred_fallthru
          _
      $region82: #{forward.1} parent=5 // pred_fallthru
        _
    $region6: #{forward.1} parent=1 // loop_footer
      %s15 = sadd.s32 1, %s11
    $region7: #{forward.1} parent=1 // loop_footer_branch
      %10 = sbr.rel target = $region3
    $region8: #{forward.1} parent=1 // loop_exit
      _

</llo_original>
